<compile_context>
chip_gen: v5e
topology: v5e:2x2
jax: 0.10.0
libtpu: 0.0.40
codegen_flags: <defaults>
</compile_context>

<pallas_src>
import functools

import jax
import jax.numpy as jnp
from jax.experimental import pallas as pl
from jax.experimental.pallas import tpu as pltpu

EPS = 1e-6


def _round_up(a, b):
    return ((a + b - 1) // b) * b


def _sum_over_h(y, H, W):
    """y: (TN, H*W) lane-dense; returns (TN, W) = sum over the H groups of W lanes."""
    h = H
    # Tree-fold: add the upper half of the current extent onto the lower half.
    while h % 2 == 0 and h > 1:
        h //= 2
        half = h * W
        y = y[:, :half] + y[:, half:2 * half]
    if h > 1:  # odd remainder (not hit for power-of-two H)
        acc = y[:, :W]
        for j in range(1, h):
            acc = acc + y[:, j * W:(j + 1) * W]
        y = acc
    return y


def _is_small_int_power(p_val):
    return (p_val is not None and float(p_val).is_integer()
            and 1.0 <= float(p_val) <= 8.0)


def _gem_kernel(p_ref, x_ref, o_ref, *, H, W, p_static):
    # p_ref: (1,) f32 in SMEM (unused when p_static is a compile-time constant)
    # x_ref: VMEM tile (TN, H*W)   (lane-dense)
    # o_ref: VMEM tile (TN, W)
    x = jnp.maximum(x_ref[...].astype(jnp.float32), EPS)    # clamp(min=eps); > 0

    if _is_small_int_power(p_static):
        # Streaming path is pure VPU: zero EUP ops per input element.
        xp = x
        for _ in range(int(p_static) - 1):
            xp = xp * x
    elif p_static is not None:
        xp = jnp.exp(p_static * jnp.log(x))                  # x ** p (EUP)
    else:
        xp = jnp.exp(p_ref[0] * jnp.log(x))                  # dynamic p (EUP)

    pooled = _sum_over_h(xp, H, W) * (1.0 / H)               # mean over H -> (TN, W)

    # The 1/p root touches only (TN, W) = 1/H of the elements -> cheap.
    if p_static == 2.0:
        out = jnp.sqrt(pooled)
    elif p_static == 1.0:
        out = pooled
    elif p_static is not None:
        out = jnp.exp(jnp.log(pooled) * (1.0 / float(p_static)))
    else:
        out = jnp.exp(jnp.log(pooled) * (1.0 / p_ref[0]))
    o_ref[...] = out.astype(o_ref.dtype)


def _hw_defaults():
    """(target f32 compute-tile bytes, scoped-VMEM limit bytes) per generation."""
    try:
        kind = jax.devices()[0].device_kind.lower()
    except Exception:
        kind = ""
    if "v5" in kind:                    # v5e: 0.82 TB/s HBM, 16 MiB default scoped VMEM
        return 4 << 20, 32 << 20
    if "v7" in kind or "7x" in kind:    # v7x: 3.2 TB/s HBM but only 64 MiB physical VMEM
        return 6 << 20, 40 << 20
    return 8 << 20, 48 << 20            # v6e and friends: 1.4 TB/s, 128 MiB VMEM


def _choose_tile_rows(N, HW, itemsize, target_bytes, min_steps=8):
    # Sublane alignment for the second-to-last block dim (8 f32 / 16 bf16 / 32 i8).
    align = max(8, 32 // max(1, itemsize))
    if N <= align:
        return N                        # single block equal to the full array dim
    # Budget on the f32 compute tile (lanes pad to a multiple of 128 in VMEM).
    row_bytes = _round_up(HW, 128) * 4
    tn = max(1, target_bytes // row_bytes)
    tn = min(tn, N)
    # Keep >= min_steps grid steps when there is enough work: both v7x
    # TensorCores get several steps each and the pipeline edges stay hidden.
    if N >= min_steps * align:
        tn = min(tn, pl.cdiv(N, min_steps))
    return max(align, _round_up(tn, align))


def _static_p_value(p):
    """float(p) when p is concrete (the usual trained-scalar case), else None."""
    if isinstance(p, (int, float)):
        return float(p)
    try:
        return float(jnp.asarray(p).reshape(-1)[0])
    except Exception:                   # traced under jit/grad -> dynamic-p path
        return None


def gem2d(x, p):
    """x: (B, C, H, W); p: scalar / (1,) array -> (B, C, W)."""
    B, C, H, W = x.shape
    N = B * C
    HW = H * W
    xf = x.reshape(N, HW)               # free: row-major contiguous view

    p_arr = jnp.asarray(p, dtype=jnp.float32).reshape(1)
    p_static = _static_p_value(p)

    itemsize = jnp.dtype(x.dtype).itemsize
    target_bytes, vmem_limit = _hw_defaults()
    TN = _choose_tile_rows(N, HW, itemsize, target_bytes)
    grid = pl.cdiv(N, TN)               # no padding copy: Pallas masks the tail block

    # Make sure the scoped-VMEM request covers the actual footprint
    # (double-buffered in/out tiles + the f32 temporaries of the compute).
    lanes_in = _round_up(HW, 128)
    lanes_out = _round_up(W, 128)
    need = (2 * TN * lanes_in * itemsize        # input double buffer
            + 2 * TN * lanes_in * 4             # f32 upcast + x**p temporaries
            + 2 * TN * lanes_out * itemsize     # output double buffer
            + (4 << 20))                        # slack
    vmem_limit = int(max(vmem_limit, need))

    if _is_small_int_power(p_static):
        transcendentals = N * W                              # only the final root
        flops = (int(p_static) + 2) * N * HW + 2 * N * W
    else:
        transcendentals = 2 * N * HW + 2 * N * W
        flops = 4 * N * HW + 2 * N * W
    cost = pl.CostEstimate(
        flops=int(flops),
        transcendentals=int(transcendentals),
        bytes_accessed=int(N * HW * itemsize + N * W * itemsize + 4))

    kernel = functools.partial(_gem_kernel, H=H, W=W, p_static=p_static)
    out = pl.pallas_call(
        kernel,
        out_shape=jax.ShapeDtypeStruct((N, W), x.dtype),
        grid=(grid,),
        in_specs=[
            pl.BlockSpec(memory_space=pltpu.MemorySpace.SMEM),   # p (scalar)
            pl.BlockSpec((TN, HW), lambda i: (i, 0)),            # x tile (lane-dense)
        ],
        out_specs=pl.BlockSpec((TN, W), lambda i: (i, 0)),
        compiler_params=pltpu.CompilerParams(
            dimension_semantics=("parallel",),
            vmem_limit_bytes=vmem_limit),
        cost_estimate=cost,
    )(p_arr, xf)

    return out.reshape(B, C, W)


def gem2d_ref(x, p):
    # Plain-JAX reference for correctness checking.
    xp = jnp.maximum(x, EPS) ** p[0]
    pooled = jnp.mean(xp, axis=-2)      # average over H -> (B, C, W)
    return pooled ** (1.0 / p[0])


if __name__ == "__main__":
    key = jax.random.PRNGKey(0)
    B, C, H, W = 2, 4, 16, 16
    x = jax.random.normal(key, (B, C, H, W), dtype=jnp.float32)

    # nn.Parameter(torch.ones(1) * p), default p=2 -> concrete => VPU fast path.
    p2 = jnp.ones((1,), dtype=jnp.float32) * 2.0
    y2 = jax.block_until_ready(gem2d(x, p2))
    assert y2.shape == (B, C, W)
    assert jnp.allclose(y2, gem2d_ref(x, p2), rtol=1e-4, atol=1e-5), "p=2 mismatch"

    # Dynamic-p path (p traced under jit) with a non-default exponent.
    p3 = jnp.ones((1,), dtype=jnp.float32) * 3.0
    y3 = jax.block_until_ready(jax.jit(gem2d)(x, p3))
    assert y3.shape == (B, C, W)
    assert jnp.allclose(y3, gem2d_ref(x, p3), rtol=1e-4, atol=1e-5), "dyn-p mismatch"

    print("KERNEL_OK")
</pallas_src>

<mosaic_0001>
module attributes {stable_mosaic.version = 11 : i64} {
  func.func @_gem_kernel(%arg0: i32, %arg1: memref<1xf32, #tpu.memory_space<smem>>, %arg2: memref<8x256xf32, #tpu.memory_space<vmem>>, %arg3: memref<8x16xf32, #tpu.memory_space<vmem>>) attributes {dimension_semantics = [#tpu.dimension_semantics<parallel>], iteration_bounds = array<i64: 1>, scalar_prefetch = 0 : i64, scratch_operands = 0 : i64, tpu.core_type = #tpu.core_type<tc>, window_params = [{transform_indices = @transform_0, window_bounds = array<i64: 1>}, {transform_indices = @transform_1, window_bounds = array<i64: 8, 256>}, {transform_indices = @transform_2, window_bounds = array<i64: 8, 16>}]} {
    %c0 = arith.constant 0 : index
    %c0_0 = arith.constant 0 : index
    %0 = vector.load %arg2[%c0, %c0_0] : memref<8x256xf32, #tpu.memory_space<vmem>>, vector<8x256xf32>
    %cst = arith.constant 9.99999997E-7 : f32
    %1 = vector.broadcast %cst : f32 to vector<8x256xf32>
    %2 = arith.maximumf %0, %1 : vector<8x256xf32>
    %3 = arith.mulf %2, %2 : vector<8x256xf32>
    %4 = vector.extract_strided_slice %3 {offsets = [0, 0], sizes = [8, 128], strides = [1, 1]} : vector<8x256xf32> to vector<8x128xf32>
    %5 = vector.extract_strided_slice %3 {offsets = [0, 128], sizes = [8, 128], strides = [1, 1]} : vector<8x256xf32> to vector<8x128xf32>
    %6 = arith.addf %4, %5 : vector<8x128xf32>
    %7 = vector.extract_strided_slice %6 {offsets = [0, 0], sizes = [8, 64], strides = [1, 1]} : vector<8x128xf32> to vector<8x64xf32>
    %8 = vector.extract_strided_slice %6 {offsets = [0, 64], sizes = [8, 64], strides = [1, 1]} : vector<8x128xf32> to vector<8x64xf32>
    %9 = arith.addf %7, %8 : vector<8x64xf32>
    %10 = vector.extract_strided_slice %9 {offsets = [0, 0], sizes = [8, 32], strides = [1, 1]} : vector<8x64xf32> to vector<8x32xf32>
    %11 = vector.extract_strided_slice %9 {offsets = [0, 32], sizes = [8, 32], strides = [1, 1]} : vector<8x64xf32> to vector<8x32xf32>
    %12 = arith.addf %10, %11 : vector<8x32xf32>
    %13 = vector.extract_strided_slice %12 {offsets = [0, 0], sizes = [8, 16], strides = [1, 1]} : vector<8x32xf32> to vector<8x16xf32>
    %14 = vector.extract_strided_slice %12 {offsets = [0, 16], sizes = [8, 16], strides = [1, 1]} : vector<8x32xf32> to vector<8x16xf32>
    %15 = arith.addf %13, %14 : vector<8x16xf32>
    %cst_1 = arith.constant 6.250000e-02 : f32
    %16 = vector.broadcast %cst_1 : f32 to vector<8x16xf32>
    %17 = arith.mulf %15, %16 : vector<8x16xf32>
    %18 = math.sqrt %17 : vector<8x16xf32>
    %c0_2 = arith.constant 0 : index
    %c0_3 = arith.constant 0 : index
    %19 = vector.load %arg3[%c0_2, %c0_3] : memref<8x16xf32, #tpu.memory_space<vmem>>, vector<8x16xf32>
    tpu.vector_store %arg3[%c0_2, %c0_3], %18 {strides = array<i32>} : memref<8x16xf32, #tpu.memory_space<vmem>>, vector<8x16xf32>,
    return
  }
  func.func @transform_0(%arg0: i32) -> i32 {
    %c0_i32 = arith.constant 0 : i32
    %c0_i32_0 = arith.constant 0 : i32
    return %c0_i32 : i32
  }
  func.func @transform_1(%arg0: i32) -> (i32, i32) {
    %c0_i32 = arith.constant 0 : i32
    %c0_i32_0 = arith.constant 0 : i32
    return %arg0, %c0_i32 : i32, i32
  }
  func.func @transform_2(%arg0: i32) -> (i32, i32) {
    %c0_i32 = arith.constant 0 : i32
    %c0_i32_0 = arith.constant 0 : i32
    return %arg0, %c0_i32 : i32, i32
  }
}

</mosaic_0001>

<llo_original>
// kernel: tpu_custom_call.1
$region0: #{tpu_custom_call.1}
  #allocation0 [shape = 'u32[]', space=smem, size = 0x4, offset = 0x4, fixed_abs, tag = 'smem constant byte address 0x4 - core index']
  #allocation1 [shape = 'u32[72,128]{1,0:T(1,128)}', space=vmem, size = 0x9000, scoped, tag = 'internal scratch']
  #allocation2 [shape = 'f32[1]{0:T(128)S(6)}', space=smem, size = 0x200, scoped, tag = 'scoped memory for tpu_custom_call.1']
  %s0 = inlined_call_operand.<no memory space> [shape: f32[1], index: 0, kind: input, shape index: {}]
  %s1 = inlined_call_operand.hbm [shape: f32[8,256], index: 1, kind: input, shape index: {}]
  %s2 = inlined_call_operand.hbm [shape: f32[8,16], index: 2, kind: output, shape index: {}]
  %s3 = sld [smem:[#allocation0]]
  $region22: #{tpu_custom_call.1} parent=0
    _
  %s5 = ssub.s32 1, %s3
  %s6 = scalar_select 0, %s5, %s3
  %7 = sst [smem:[#allocation2]] %s0
  $region1: #{tpu_custom_call.1} parent=0
    #allocation3 [shape = 'u8[8192]{0}', space=vmem, size = 0x2000, scoped, tag = 'input window, operand 1, single buffered']
    #allocation4 [shape = 's32[1]{0}', space=sflag, size = 0x4, scoped, tag = 'scoped memory for tpu_custom_call.1']
    #allocation5 [shape = 's32[1]{0}', space=sflag, size = 0x4, scoped, tag = 'scoped memory for tpu_custom_call.1']
    #allocation6 [shape = 'u8[4096]{0}', space=vmem, size = 0x1000, scoped, tag = 'output window, operand 0, single buffered']
    %8 = vsyncpa [#allocation4], 0
    %9 = vsyncpa [#allocation5], 0
    // Predicated region
    $region2: #{tpu_custom_call.1} parent=1 // pred_check
      _
    $region3: #{tpu_custom_call.1} parent=1 // pred_check_branch
      %11 = sbr.rel (0) target = $region5
    $region4: #{tpu_custom_call.1} parent=1 // pred_region
      _
    $region5: #{tpu_custom_call.1} parent=1 // pred_fallthru
      _
    // Predicated region
    $region6: #{tpu_custom_call.1} parent=1 // pred_check
      _
    $region7: #{tpu_custom_call.1} parent=1 // pred_check_branch
      %13 = sbr.rel (0) target = $region9
    $region8: #{tpu_custom_call.1} parent=1 // pred_region
      %15 = vsyncadd [#allocation4], 0
      %s17 = sshll.u32 %s1, 4
      %s18 = int_to_ptr.hbm [resolvable:$true] %s17
      %s19 = sshll.u32 [#allocation3], 4
      %s20 = int_to_ptr.vmem [resolvable:$true] %s19
      %22 = dma.hbm_to_vmem [thread:$0]  %s18, 256, %s20, [#allocation4]
    $region9: #{tpu_custom_call.1} parent=1 // pred_fallthru
      _
    // Predicated region
    $region10: #{tpu_custom_call.1} parent=1 // pred_check
      _
    $region11: #{tpu_custom_call.1} parent=1 // pred_check_branch
      %24 = sbr.rel (0) target = $region13
    $region12: #{tpu_custom_call.1} parent=1 // pred_region
      %26 = dma.done [#allocation4], 256
    $region13: #{tpu_custom_call.1} parent=1 // pred_fallthru
      _
    %v27 = vld [vmem:[#allocation3] sm:$0xff]
    %v28 = vld [vmem:[#allocation3 + $0x8] sm:$0xff]
    %v29 = vmax.f32 %v27, 1e-06
    %v30 = vmax.f32 %v28, 1e-06
    %v31 = vmul.f32 %v29, %v29
    %v32 = vmul.f32 %v30, %v30
    %v33 = vadd.f32 %v31, %v32
    %35 = vrot.lane.b32.xlu0 %v33, 64
    %v36 = vpop.permute.xlu0 %35
    %v38 = vadd.f32 %v33, %v36
    %40 = vrot.lane.b32.xlu0 %v38, 96
    %v41 = vpop.permute.xlu0 %40
    %v43 = vadd.f32 %v38, %v41
    %45 = vrot.lane.b32.xlu0 %v43, 112
    %v46 = vpop.permute.xlu0 %45
    %v48 = vadd.f32 %v43, %v46
    %v49 = vmul.f32 %v48, 0.0625
    %v50 = vrsqrt.pop %v49
    %v51 = vmul.f32 %v50, %v49
    %v52 = vmul.f32 %v51, %v50
    %v53 = vmul.f32 0.5, %v52
    %v54 = vsub.f32 1.5, %v53
    %v55 = vmul.f32 %v50, %v54
    %v56 = vmul.f32 %v49, %v55
    %vm57 = vcmp.eq.f32.partialorder %v49, inf
    %v58 = vsel %vm57, %v49, %v56
    %vm59 = vcmp.eq.f32.partialorder %v49, 0.0
    %v60 = vand.u32 %v49, 2147483648
    %v61 = vsel %vm59, %v60, %v58
    %vm62 = vcmask 130048
    %63 = vst.msk [vmem:[#allocation6] sm:$0xff] %vm62, %v61
    // Predicated region
    $region14: #{tpu_custom_call.1} parent=1 // pred_check
      _
    $region15: #{tpu_custom_call.1} parent=1 // pred_check_branch
      %65 = sbr.rel (0) target = $region17
    $region16: #{tpu_custom_call.1} parent=1 // pred_region
      %67 = vsyncadd [#allocation5], 0
      %s69 = sshll.u32 [#allocation6], 4
      %s70 = int_to_ptr.vmem [resolvable:$true] %s69
      %s71 = sshll.u32 %s2, 4
      %s72 = int_to_ptr.hbm [resolvable:$true] %s71
      %74 = dma.vmem_to_hbm [thread:$0]  %s70, 128, %s72, [#allocation5]
    $region17: #{tpu_custom_call.1} parent=1 // pred_fallthru
      _
    // Predicated region
    $region18: #{tpu_custom_call.1} parent=1 // pred_check
      _
    $region19: #{tpu_custom_call.1} parent=1 // pred_check_branch
      %76 = sbr.rel (0) target = $region21
    $region20: #{tpu_custom_call.1} parent=1 // pred_region
      %78 = dma.done [#allocation5], 128
    $region21: #{tpu_custom_call.1} parent=1 // pred_fallthru
      _
    %79 = vsyncpa [#allocation4], 1
    %80 = vsyncpa [#allocation5], 1

</llo_original>
